<compile_context>
chip_gen: v5e
topology: v5e:2x2
jax: 0.10.0
libtpu: 0.0.40
codegen_flags: <defaults>
</compile_context>

<pallas_src>
import functools

import jax
import jax.numpy as jnp
from jax.experimental import pallas as pl
from jax.experimental.pallas import tpu as pltpu

# Rows per in-kernel sub-chunk: a (256, 128) f32 intermediate is ~128 KiB,
# i.e. about half the vreg file, so the compiler never has to juggle a
# tile-sized live value even with large batch tiles.
_SUB_CHUNK = 256


def _value_net_kernel(x_ref, w1_ref, b1_ref, w2_ref, b2_ref,
                      w3_ref, b3_ref, w4_ref, b4_ref, out_ref):
    """One batch tile: x (TB, xdim) -> value (TB, 1)."""
    w_dtype = w1_ref.dtype
    tile_b = x_ref.shape[0]

    def one_chunk(r0, rows):
        # In-kernel cast to the matmul dtype (instead of a wrapper-side
        # full-array astype pass over x in HBM).
        xc = x_ref[pl.ds(r0, rows), :].astype(w_dtype)
        # fc1..fc3: MXU matmuls with f32 accumulation; bias/ReLU kept in f32.
        h = jnp.dot(xc, w1_ref[...], preferred_element_type=jnp.float32)
        h = jnp.maximum(h + b1_ref[...], 0.0)
        h = jnp.dot(h.astype(w_dtype), w2_ref[...],
                    preferred_element_type=jnp.float32)
        h = jnp.maximum(h + b2_ref[...], 0.0)
        h = jnp.dot(h.astype(w_dtype), w3_ref[...],
                    preferred_element_type=jnp.float32)
        h = jnp.maximum(h + b3_ref[...], 0.0)
        # fc_value: a (rows,128)@(128,1) matmul wastes a full MXU push for one
        # column; use a VPU multiply + lane reduce instead (w4 is a (1,H) row).
        v = jnp.sum(h * w4_ref[...], axis=-1, keepdims=True) + b4_ref[...]
        out_ref[pl.ds(r0, rows), :] = v.astype(out_ref.dtype)

    # Static sub-chunk loop (tile_b and _SUB_CHUNK are compile-time constants),
    # all slice offsets/sizes are static -> aligned loads/stores.
    r0 = 0
    while r0 < tile_b:
        rows = min(_SUB_CHUNK, tile_b - r0)
        one_chunk(r0, rows)
        r0 += rows


def _round_up(n, m):
    return ((n + m - 1) // m) * m


def _suggested_min_grid_tiles():
    """>=2 on parts with 2 TensorCores per chip (v7x) so the 'parallel' batch
    axis actually gives both cores work; 1 elsewhere."""
    try:
        kind = jax.devices()[0].device_kind.lower()
        return 2 if "v7" in kind else 1
    except Exception:
        return 1


@functools.partial(
    jax.jit,
    static_argnames=("compute_dtype", "max_batch_tile", "min_grid_tiles"))
def value_net_forward(x, params, *, compute_dtype=jnp.bfloat16,
                      max_batch_tile=1024, min_grid_tiles=1):
    """x: [B, xdim]. params: dict of (W, b) per layer. Returns [B, 1] f32."""
    w1, b1 = params["fc1"]
    w2, b2 = params["fc2"]
    w3, b3 = params["fc3"]
    w4, b4 = params["fc_value"]

    B, xdim = x.shape
    hdim = w1.shape[1]

    # Sublane multiple for the (streamed) x / out blocks is set by x's stored
    # dtype (x is NOT pre-cast in the wrapper): 8 for f32, 16 for bf16, ...
    row_mult = max(8, 32 // x.dtype.itemsize)

    # cdiv-based tile sizing: at most row_mult-1 padded rows per tile, instead
    # of up to ~2x padded work when B is just above a tile multiple.
    n_tiles_target = max(pl.cdiv(B, max_batch_tile), min_grid_tiles)
    tile_b = _round_up(pl.cdiv(B, n_tiles_target), row_mult)
    num_tiles = pl.cdiv(B, tile_b)

    # Weights for fc1-fc3 in the matmul dtype (bf16 by default: bf16-native MXU
    # on v5e/v6e/v7x, ~3x fewer MXU pushes than emulated f32 matmuls).  Biases,
    # the fc_value row and all accumulation stay f32.
    w1 = w1.astype(compute_dtype)
    w2 = w2.astype(compute_dtype)
    w3 = w3.astype(compute_dtype)
    b1 = b1.reshape(1, hdim).astype(jnp.float32)
    b2 = b2.reshape(1, hdim).astype(jnp.float32)
    b3 = b3.reshape(1, hdim).astype(jnp.float32)
    w4_row = w4.reshape(1, hdim).astype(jnp.float32)   # (hdim, 1) -> (1, hdim)
    b4 = b4.reshape(1, 1).astype(jnp.float32)

    const = lambda i: (0, 0)  # weights/biases: same block every step (VMEM-resident)
    grid_spec = pltpu.PrefetchScalarGridSpec(
        num_scalar_prefetch=0,
        grid=(num_tiles,),
        in_specs=[
            pl.BlockSpec((tile_b, xdim), lambda i: (i, 0)),   # x tile (streamed)
            pl.BlockSpec((xdim, hdim), const),                # fc1 W
            pl.BlockSpec((1, hdim), const),                   # fc1 b
            pl.BlockSpec((hdim, hdim), const),                # fc2 W
            pl.BlockSpec((1, hdim), const),                   # fc2 b
            pl.BlockSpec((hdim, hdim), const),                # fc3 W
            pl.BlockSpec((1, hdim), const),                   # fc3 b
            pl.BlockSpec((1, hdim), const),                   # fc_value W as a row
            pl.BlockSpec((1, 1), const),                      # fc_value b
        ],
        out_specs=pl.BlockSpec((tile_b, 1), lambda i: (i, 0)),
    )

    rows_covered = num_tiles * tile_b
    bytes_in = x.size * x.dtype.itemsize + sum(
        a.size * a.dtype.itemsize
        for a in (w1, b1, w2, b2, w3, b3, w4_row, b4))
    cost = pl.CostEstimate(
        flops=2 * rows_covered * (xdim * hdim + 2 * hdim * hdim + hdim),
        transcendentals=0,
        bytes_accessed=bytes_in + B * 4,
    )

    out = pl.pallas_call(
        _value_net_kernel,
        out_shape=jax.ShapeDtypeStruct((B, 1), jnp.float32),
        grid_spec=grid_spec,
        compiler_params=pltpu.CompilerParams(
            # Batch axis is embarrassingly parallel: v7x shards grid steps
            # across its 2 TensorCores; harmless no-op on v5e/v6e.
            dimension_semantics=("parallel",),
        ),
        cost_estimate=cost,
    )(x, w1, b1, w2, b2, w3, b3, w4_row, b4)

    return out


def init_params(key, xdim, hdim=128):
    """Deterministic init mimicking PyTorch nn.Linear default U(-1/sqrt(fan_in), +)."""
    def linear(key, fan_in, fan_out):
        kw, kb = jax.random.split(key)
        bound = 1.0 / jnp.sqrt(jnp.float32(fan_in))
        w = jax.random.uniform(kw, (fan_in, fan_out), jnp.float32, -bound, bound)
        b = jax.random.uniform(kb, (fan_out,), jnp.float32, -bound, bound)
        return w, b

    k1, k2, k3, k4 = jax.random.split(key, 4)
    return {
        "fc1": linear(k1, xdim, hdim),
        "fc2": linear(k2, hdim, hdim),
        "fc3": linear(k3, hdim, hdim),
        "fc_value": linear(k4, hdim, 1),
    }


def _reference_forward(x, params):
    w1, b1 = params["fc1"]
    w2, b2 = params["fc2"]
    w3, b3 = params["fc3"]
    w4, b4 = params["fc_value"]
    h = jnp.maximum(x @ w1 + b1, 0.0)
    h = jnp.maximum(h @ w2 + b2, 0.0)
    h = jnp.maximum(h @ w3 + b3, 0.0)
    return h @ w4 + b4


if __name__ == "__main__":
    key = jax.random.PRNGKey(0)
    k_params, k_x = jax.random.split(key)

    B, XDIM, HDIM = 8, 32, 128
    params = init_params(k_params, XDIM, HDIM)
    x = jax.random.normal(k_x, (B, XDIM), jnp.float32)

    ref = _reference_forward(x, params)
    min_tiles = _suggested_min_grid_tiles()

    # Default bf16-operand / f32-accumulate path (MXU-friendly on v5e/v6e/v7x).
    out_bf16 = jax.block_until_ready(
        value_net_forward(x, params, min_grid_tiles=min_tiles))
    assert out_bf16.shape == (B, 1), out_bf16.shape
    assert jnp.allclose(out_bf16, ref, atol=5e-2, rtol=5e-2), (out_bf16, ref)

    # Full-precision path for strict-accuracy use.
    out_f32 = jax.block_until_ready(
        value_net_forward(x, params, compute_dtype=jnp.float32,
                          min_grid_tiles=min_tiles))
    assert out_f32.shape == (B, 1), out_f32.shape
    assert jnp.allclose(out_f32, ref, atol=1e-4, rtol=1e-4), (out_f32, ref)

    # Exercise the ragged-tail / multi-tile / sub-chunk paths (cdiv grid with a
    # partial last block; no wrapper-side padding of x).
    B2 = 300
    x2 = jax.random.normal(jax.random.PRNGKey(1), (B2, XDIM), jnp.float32)
    ref2 = _reference_forward(x2, params)
    out2 = jax.block_until_ready(
        value_net_forward(x2, params, max_batch_tile=128, min_grid_tiles=2))
    assert out2.shape == (B2, 1), out2.shape
    assert jnp.allclose(out2, ref2, atol=5e-2, rtol=5e-2)

    print("KERNEL_OK")
</pallas_src>

<mosaic_0001>
module attributes {stable_mosaic.version = 11 : i64} {
  func.func @_value_net_kernel(%arg0: i32, %arg1: memref<8x32xf32, #tpu.memory_space<vmem>>, %arg2: memref<32x128xbf16, #tpu.memory_space<vmem>>, %arg3: memref<1x128xf32, #tpu.memory_space<vmem>>, %arg4: memref<128x128xbf16, #tpu.memory_space<vmem>>, %arg5: memref<1x128xf32, #tpu.memory_space<vmem>>, %arg6: memref<128x128xbf16, #tpu.memory_space<vmem>>, %arg7: memref<1x128xf32, #tpu.memory_space<vmem>>, %arg8: memref<1x128xf32, #tpu.memory_space<vmem>>, %arg9: memref<1x1xf32, #tpu.memory_space<vmem>>, %arg10: memref<8x1xf32, #tpu.memory_space<vmem>>) attributes {dimension_semantics = [#tpu.dimension_semantics<parallel>], iteration_bounds = array<i64: 1>, scalar_prefetch = 0 : i64, scratch_operands = 0 : i64, tpu.core_type = #tpu.core_type<tc>, window_params = [{transform_indices = @transform_0, window_bounds = array<i64: 8, 32>}, {pipeline_mode = #tpu.pipeline_mode<synchronous>, transform_indices = @transform_1, window_bounds = array<i64: 32, 128>}, {pipeline_mode = #tpu.pipeline_mode<synchronous>, transform_indices = @transform_2, window_bounds = array<i64: 1, 128>}, {pipeline_mode = #tpu.pipeline_mode<synchronous>, transform_indices = @transform_3, window_bounds = array<i64: 128, 128>}, {pipeline_mode = #tpu.pipeline_mode<synchronous>, transform_indices = @transform_4, window_bounds = array<i64: 1, 128>}, {pipeline_mode = #tpu.pipeline_mode<synchronous>, transform_indices = @transform_5, window_bounds = array<i64: 128, 128>}, {pipeline_mode = #tpu.pipeline_mode<synchronous>, transform_indices = @transform_6, window_bounds = array<i64: 1, 128>}, {pipeline_mode = #tpu.pipeline_mode<synchronous>, transform_indices = @transform_7, window_bounds = array<i64: 1, 128>}, {pipeline_mode = #tpu.pipeline_mode<synchronous>, transform_indices = @transform_8, window_bounds = array<i64: 1, 1>}, {transform_indices = @transform_9, window_bounds = array<i64: 8, 1>}]} {
    %c0 = arith.constant 0 : index
    %c0_0 = arith.constant 0 : index
    %0 = vector.load %arg1[%c0, %c0_0] : memref<8x32xf32, #tpu.memory_space<vmem>>, vector<8x32xf32>
    %1 = arith.truncf %0 : vector<8x32xf32> to vector<8x32xbf16>
    %c0_1 = arith.constant 0 : index
    %c0_2 = arith.constant 0 : index
    %2 = vector.load %arg2[%c0_1, %c0_2] : memref<32x128xbf16, #tpu.memory_space<vmem>>, vector<32x128xbf16>
    %cst = arith.constant dense<0.000000e+00> : vector<8x128xf32>
    %3 = tpu.matmul %1, %2, %cst {dimension_numbers = #tpu.dot_dimension_numbers<[1], [0], [0], [1], [0, 0, 1, 1], [], []>} : vector<8x32xbf16>, vector<32x128xbf16>, vector<8x128xf32> -> vector<8x128xf32>
    %c0_3 = arith.constant 0 : index
    %c0_4 = arith.constant 0 : index
    %4 = vector.load %arg3[%c0_3, %c0_4] : memref<1x128xf32, #tpu.memory_space<vmem>>, vector<1x128xf32>
    %5 = vector.broadcast %4 : vector<1x128xf32> to vector<8x128xf32>
    %6 = arith.addf %3, %5 : vector<8x128xf32>
    %cst_5 = arith.constant 0.000000e+00 : f32
    %7 = vector.broadcast %cst_5 : f32 to vector<8x128xf32>
    %8 = arith.maximumf %6, %7 : vector<8x128xf32>
    %9 = arith.truncf %8 : vector<8x128xf32> to vector<8x128xbf16>
    %c0_6 = arith.constant 0 : index
    %c0_7 = arith.constant 0 : index
    %10 = vector.load %arg4[%c0_6, %c0_7] : memref<128x128xbf16, #tpu.memory_space<vmem>>, vector<128x128xbf16>
    %cst_8 = arith.constant dense<0.000000e+00> : vector<8x128xf32>
    %11 = tpu.matmul %9, %10, %cst_8 {dimension_numbers = #tpu.dot_dimension_numbers<[1], [0], [0], [1], [0, 0, 1, 1], [], []>} : vector<8x128xbf16>, vector<128x128xbf16>, vector<8x128xf32> -> vector<8x128xf32>
    %c0_9 = arith.constant 0 : index
    %c0_10 = arith.constant 0 : index
    %12 = vector.load %arg5[%c0_9, %c0_10] : memref<1x128xf32, #tpu.memory_space<vmem>>, vector<1x128xf32>
    %13 = vector.broadcast %12 : vector<1x128xf32> to vector<8x128xf32>
    %14 = arith.addf %11, %13 : vector<8x128xf32>
    %cst_11 = arith.constant 0.000000e+00 : f32
    %15 = vector.broadcast %cst_11 : f32 to vector<8x128xf32>
    %16 = arith.maximumf %14, %15 : vector<8x128xf32>
    %17 = arith.truncf %16 : vector<8x128xf32> to vector<8x128xbf16>
    %c0_12 = arith.constant 0 : index
    %c0_13 = arith.constant 0 : index
    %18 = vector.load %arg6[%c0_12, %c0_13] : memref<128x128xbf16, #tpu.memory_space<vmem>>, vector<128x128xbf16>
    %cst_14 = arith.constant dense<0.000000e+00> : vector<8x128xf32>
    %19 = tpu.matmul %17, %18, %cst_14 {dimension_numbers = #tpu.dot_dimension_numbers<[1], [0], [0], [1], [0, 0, 1, 1], [], []>} : vector<8x128xbf16>, vector<128x128xbf16>, vector<8x128xf32> -> vector<8x128xf32>
    %c0_15 = arith.constant 0 : index
    %c0_16 = arith.constant 0 : index
    %20 = vector.load %arg7[%c0_15, %c0_16] : memref<1x128xf32, #tpu.memory_space<vmem>>, vector<1x128xf32>
    %21 = vector.broadcast %20 : vector<1x128xf32> to vector<8x128xf32>
    %22 = arith.addf %19, %21 : vector<8x128xf32>
    %cst_17 = arith.constant 0.000000e+00 : f32
    %23 = vector.broadcast %cst_17 : f32 to vector<8x128xf32>
    %24 = arith.maximumf %22, %23 : vector<8x128xf32>
    %c0_18 = arith.constant 0 : index
    %c0_19 = arith.constant 0 : index
    %25 = vector.load %arg8[%c0_18, %c0_19] : memref<1x128xf32, #tpu.memory_space<vmem>>, vector<1x128xf32>
    %26 = vector.broadcast %25 : vector<1x128xf32> to vector<8x128xf32>
    %27 = arith.mulf %24, %26 : vector<8x128xf32>
    %cst_20 = arith.constant dense<0.000000e+00> : vector<8xf32>
    %28 = vector.multi_reduction <add>, %27, %cst_20 [1] : vector<8x128xf32> to vector<8xf32>
    %29 = vector.shape_cast %28 : vector<8xf32> to vector<8x1xf32>
    %c0_21 = arith.constant 0 : index
    %c0_22 = arith.constant 0 : index
    %30 = vector.load %arg9[%c0_21, %c0_22] : memref<1x1xf32, #tpu.memory_space<vmem>>, vector<1x1xf32>
    %31 = vector.broadcast %30 : vector<1x1xf32> to vector<8x1xf32>
    %32 = arith.addf %29, %31 : vector<8x1xf32>
    %c0_23 = arith.constant 0 : index
    %c0_24 = arith.constant 0 : index
    %33 = vector.load %arg10[%c0_23, %c0_24] : memref<8x1xf32, #tpu.memory_space<vmem>>, vector<8x1xf32>
    tpu.vector_store %arg10[%c0_23, %c0_24], %32 {strides = array<i32>} : memref<8x1xf32, #tpu.memory_space<vmem>>, vector<8x1xf32>,
    return
  }
  func.func @transform_0(%arg0: i32) -> (i32, i32) {
    %c0_i32 = arith.constant 0 : i32
    %c0_i32_0 = arith.constant 0 : i32
    return %arg0, %c0_i32 : i32, i32
  }
  func.func @transform_1(%arg0: i32) -> (i32, i32) {
    %c0_i32 = arith.constant 0 : i32
    %c0_i32_0 = arith.constant 0 : i32
    %c0_i32_1 = arith.constant 0 : i32
    return %c0_i32, %c0_i32_0 : i32, i32
  }
  func.func @transform_2(%arg0: i32) -> (i32, i32) {
    %c0_i32 = arith.constant 0 : i32
    %c0_i32_0 = arith.constant 0 : i32
    %c0_i32_1 = arith.constant 0 : i32
    return %c0_i32, %c0_i32_0 : i32, i32
  }
  func.func @transform_3(%arg0: i32) -> (i32, i32) {
    %c0_i32 = arith.constant 0 : i32
    %c0_i32_0 = arith.constant 0 : i32
    %c0_i32_1 = arith.constant 0 : i32
    return %c0_i32, %c0_i32_0 : i32, i32
  }
  func.func @transform_4(%arg0: i32) -> (i32, i32) {
    %c0_i32 = arith.constant 0 : i32
    %c0_i32_0 = arith.constant 0 : i32
    %c0_i32_1 = arith.constant 0 : i32
    return %c0_i32, %c0_i32_0 : i32, i32
  }
  func.func @transform_5(%arg0: i32) -> (i32, i32) {
    %c0_i32 = arith.constant 0 : i32
    %c0_i32_0 = arith.constant 0 : i32
    %c0_i32_1 = arith.constant 0 : i32
    return %c0_i32, %c0_i32_0 : i32, i32
  }
  func.func @transform_6(%arg0: i32) -> (i32, i32) {
    %c0_i32 = arith.constant 0 : i32
    %c0_i32_0 = arith.constant 0 : i32
    %c0_i32_1 = arith.constant 0 : i32
    return %c0_i32, %c0_i32_0 : i32, i32
  }
  func.func @transform_7(%arg0: i32) -> (i32, i32) {
    %c0_i32 = arith.constant 0 : i32
    %c0_i32_0 = arith.constant 0 : i32
    %c0_i32_1 = arith.constant 0 : i32
    return %c0_i32, %c0_i32_0 : i32, i32
  }
  func.func @transform_8(%arg0: i32) -> (i32, i32) {
    %c0_i32 = arith.constant 0 : i32
    %c0_i32_0 = arith.constant 0 : i32
    %c0_i32_1 = arith.constant 0 : i32
    return %c0_i32, %c0_i32_0 : i32, i32
  }
  func.func @transform_9(%arg0: i32) -> (i32, i32) {
    %c0_i32 = arith.constant 0 : i32
    %c0_i32_0 = arith.constant 0 : i32
    return %arg0, %c0_i32 : i32, i32
  }
}

</mosaic_0001>

<llo_original>
// kernel: value_net_forward.1
$region0: #{value_net_forward.1}
  #allocation0 [shape = 'u32[]', space=smem, size = 0x4, offset = 0x4, fixed_abs, tag = 'smem constant byte address 0x4 - core index']
  #allocation1 [shape = 'u32[72,128]{1,0:T(1,128)}', space=vmem, size = 0x9000, scoped, tag = 'internal scratch']
  #allocation2 [shape = 'f32[1,1]{1,0:T(1,128)S(1)}', space=vmem, size = 0x200, scoped, tag = 'scoped memory for value_net_forward.1']
  %s0 = inlined_call_operand.vmem [shape: f32[8,32], index: 0, kind: input, shape index: {}]
  %s1 = inlined_call_operand.vmem [shape: bf16[32,128], index: 1, kind: input, shape index: {}]
  %s2 = inlined_call_operand.vmem [shape: f32[1,128], index: 2, kind: input, shape index: {}]
  %s3 = inlined_call_operand.vmem [shape: bf16[128,128], index: 3, kind: input, shape index: {}]
  %s4 = inlined_call_operand.vmem [shape: f32[1,128], index: 4, kind: input, shape index: {}]
  %s5 = inlined_call_operand.vmem [shape: bf16[128,128], index: 5, kind: input, shape index: {}]
  %s6 = inlined_call_operand.vmem [shape: f32[1,128], index: 6, kind: input, shape index: {}]
  %s7 = inlined_call_operand.vmem [shape: f32[1,128], index: 7, kind: input, shape index: {}]
  %s8 = inlined_call_operand.<no memory space> [shape: f32[1,1], index: 8, kind: input, shape index: {}]
  %s9 = inlined_call_operand.vmem [shape: f32[8,1], index: 9, kind: output, shape index: {}]
  %s10 = sld [smem:[#allocation0]]
  $region46: #{value_net_forward.1} parent=0
    _
  %s12 = ssub.s32 1, %s10
  %s13 = scalar_select 0, %s12, %s10
  %v14 = vstv %s8
  %15 = vst [vmem:[#allocation2] sm:$0x1] %v14
  // Predicated region
  $region2: #{value_net_forward.1} parent=0 // pred_check
    _
  $region3: #{value_net_forward.1} parent=0 // pred_check_branch
    %17 = sbr.rel (0) target = $region5
  $region4: #{value_net_forward.1} parent=0 // pred_region
    _
  $region5: #{value_net_forward.1} parent=0 // pred_fallthru
    _
  // Predicated region
  $region6: #{value_net_forward.1} parent=0 // pred_check
    _
  $region7: #{value_net_forward.1} parent=0 // pred_check_branch
    %19 = sbr.rel (0) target = $region9
  $region8: #{value_net_forward.1} parent=0 // pred_region
    _
  $region9: #{value_net_forward.1} parent=0 // pred_fallthru
    _
  // Predicated region
  $region10: #{value_net_forward.1} parent=0 // pred_check
    _
  $region11: #{value_net_forward.1} parent=0 // pred_check_branch
    %21 = sbr.rel (0) target = $region13
  $region12: #{value_net_forward.1} parent=0 // pred_region
    _
  $region13: #{value_net_forward.1} parent=0 // pred_fallthru
    _
  // Predicated region
  $region14: #{value_net_forward.1} parent=0 // pred_check
    _
  $region15: #{value_net_forward.1} parent=0 // pred_check_branch
    %23 = sbr.rel (0) target = $region17
  $region16: #{value_net_forward.1} parent=0 // pred_region
    _
  $region17: #{value_net_forward.1} parent=0 // pred_fallthru
    _
  // Predicated region
  $region18: #{value_net_forward.1} parent=0 // pred_check
    _
  $region19: #{value_net_forward.1} parent=0 // pred_check_branch
    %25 = sbr.rel (0) target = $region21
  $region20: #{value_net_forward.1} parent=0 // pred_region
    _
  $region21: #{value_net_forward.1} parent=0 // pred_fallthru
    _
  // Predicated region
  $region22: #{value_net_forward.1} parent=0 // pred_check
    _
  $region23: #{value_net_forward.1} parent=0 // pred_check_branch
    %27 = sbr.rel (0) target = $region25
  $region24: #{value_net_forward.1} parent=0 // pred_region
    _
  $region25: #{value_net_forward.1} parent=0 // pred_fallthru
    _
  // Predicated region
  $region26: #{value_net_forward.1} parent=0 // pred_check
    _
  $region27: #{value_net_forward.1} parent=0 // pred_check_branch
    %29 = sbr.rel (0) target = $region29
  $region28: #{value_net_forward.1} parent=0 // pred_region
    _
  $region29: #{value_net_forward.1} parent=0 // pred_fallthru
    _
  // Predicated region
  $region30: #{value_net_forward.1} parent=0 // pred_check
    _
  $region31: #{value_net_forward.1} parent=0 // pred_check_branch
    %31 = sbr.rel (0) target = $region33
  $region32: #{value_net_forward.1} parent=0 // pred_region
    _
  $region33: #{value_net_forward.1} parent=0 // pred_fallthru
    _
  // Predicated region
  $region34: #{value_net_forward.1} parent=0 // pred_check
    _
  $region35: #{value_net_forward.1} parent=0 // pred_check_branch
    %33 = sbr.rel (0) target = $region37
  $region36: #{value_net_forward.1} parent=0 // pred_region
    _
  $region37: #{value_net_forward.1} parent=0 // pred_fallthru
    _
  %v35 = vld [vmem:[%s0] sm:$0xff]
  %v36 = vpack.c.bf16 %v35, %v35
  %v37 = vld [vmem:[%s1] sm:$0xf]
  %v38 = vld [vmem:[%s1 + $0x4] sm:$0xf]
  %v39 = vld [vmem:[%s1 + $0x8] sm:$0xf]
  %v40 = vld [vmem:[%s1 + $0xc] sm:$0xf]
  %v41 = vld [vmem:[%s2] sm:$0x1]
  %v43 = vperm.slane %v41, 0
  %v49 = vunpack.c.l.b16 %v37
  %v50 = vunpack.c.l.b16 %v38
  %v51 = vunpack.c.l.b16 %v39
  %v52 = vunpack.c.l.b16 %v40
  %v53 = vpack.c.b16 %v50, %v49
  %v54 = vpack.c.b16 %v52, %v51
  %vm57 = vcmask 261120
  %v59 = vsel %vm57, %v36, 0
  %61 = vmatpush.bf16.msra.mxu0 0
  %62 = vmatpush.bf16.msra.mxu0 0
  %63 = vmatpush.bf16.msra.mxu0 0
  %64 = vmatpush.bf16.msra.mxu0 0
  %65 = vmatpush.bf16.msra.mxu0 0
  %66 = vmatpush.bf16.msra.mxu0 0
  %67 = vmatpush.bf16.msra.mxu0 %v54
  %68 = vmatpush.bf16.msra.mxu0 %v53
  %69 = vmatmul.bf16.gmra.mxu0 %v59
  %v70 = vpop.f32.mrf.mxu0
  %v71 = vadd.f32 %v43, %v70
  %v72 = vpop.f32.mrf.mxu0
  %73 = vdwg.mxu0
  %v74 = vmax.f32 %v71, 0.0
  %v75 = vpack.c.bf16 %v74, %v74
  %v76 = vld [vmem:[%s3] sm:$0xf]
  %v77 = vld [vmem:[%s3 + $0x4] sm:$0xf]
  %v78 = vld [vmem:[%s3 + $0x8] sm:$0xf]
  %v79 = vld [vmem:[%s3 + $0xc] sm:$0xf]
  %v80 = vld [vmem:[%s3 + $0x10] sm:$0xf]
  %v81 = vld [vmem:[%s3 + $0x14] sm:$0xf]
  %v82 = vld [vmem:[%s3 + $0x18] sm:$0xf]
  %v83 = vld [vmem:[%s3 + $0x1c] sm:$0xf]
  %v84 = vld [vmem:[%s3 + $0x20] sm:$0xf]
  %v85 = vld [vmem:[%s3 + $0x24] sm:$0xf]
  %v86 = vld [vmem:[%s3 + $0x28] sm:$0xf]
  %v87 = vld [vmem:[%s3 + $0x2c] sm:$0xf]
  %v88 = vld [vmem:[%s3 + $0x30] sm:$0xf]
  %v89 = vld [vmem:[%s3 + $0x34] sm:$0xf]
  %v90 = vld [vmem:[%s3 + $0x38] sm:$0xf]
  %v91 = vld [vmem:[%s3 + $0x3c] sm:$0xf]
  %v92 = vld [vmem:[%s4] sm:$0x1]
  %v94 = vperm.slane %v92, 0
  %v112 = vunpack.c.l.b16 %v76
  %v113 = vunpack.c.l.b16 %v77
  %v114 = vunpack.c.l.b16 %v78
  %v115 = vunpack.c.l.b16 %v79
  %v116 = vunpack.c.l.b16 %v80
  %v117 = vunpack.c.l.b16 %v81
  %v118 = vunpack.c.l.b16 %v82
  %v119 = vunpack.c.l.b16 %v83
  %v120 = vunpack.c.l.b16 %v84
  %v121 = vunpack.c.l.b16 %v85
  %v122 = vunpack.c.l.b16 %v86
  %v123 = vunpack.c.l.b16 %v87
  %v124 = vunpack.c.l.b16 %v88
  %v125 = vunpack.c.l.b16 %v89
  %v126 = vunpack.c.l.b16 %v90
  %v127 = vunpack.c.l.b16 %v91
  %v128 = vpack.c.b16 %v113, %v112
  %v129 = vpack.c.b16 %v115, %v114
  %v130 = vpack.c.b16 %v117, %v116
  %v131 = vpack.c.b16 %v119, %v118
  %v132 = vpack.c.b16 %v121, %v120
  %v133 = vpack.c.b16 %v123, %v122
  %v134 = vpack.c.b16 %v125, %v124
  %v135 = vpack.c.b16 %v127, %v126
  %144 = vmatpush.bf16.msra.mxu0 %v135
  %145 = vmatpush.bf16.msra.mxu0 %v134
  %146 = vmatpush.bf16.msra.mxu0 %v133
  %147 = vmatpush.bf16.msra.mxu0 %v132
  %148 = vmatpush.bf16.msra.mxu0 %v131
  %149 = vmatpush.bf16.msra.mxu0 %v130
  %150 = vmatpush.bf16.msra.mxu0 %v129
  %151 = vmatpush.bf16.msra.mxu0 %v128
  %152 = vmatmul.bf16.gmra.mxu0 %v75
  %v153 = vpop.f32.mrf.mxu0
  %v154 = vadd.f32 %v94, %v153
  %v155 = vpop.f32.mrf.mxu0
  %156 = vdwg.mxu0
  %v157 = vmax.f32 %v154, 0.0
  %v158 = vpack.c.bf16 %v157, %v157
  %v159 = vld [vmem:[%s5] sm:$0xf]
  %v160 = vld [vmem:[%s5 + $0x4] sm:$0xf]
  %v161 = vld [vmem:[%s5 + $0x8] sm:$0xf]
  %v162 = vld [vmem:[%s5 + $0xc] sm:$0xf]
  %v163 = vld [vmem:[%s5 + $0x10] sm:$0xf]
  %v164 = vld [vmem:[%s5 + $0x14] sm:$0xf]
  %v165 = vld [vmem:[%s5 + $0x18] sm:$0xf]
  %v166 = vld [vmem:[%s5 + $0x1c] sm:$0xf]
  %v167 = vld [vmem:[%s5 + $0x20] sm:$0xf]
  %v168 = vld [vmem:[%s5 + $0x24] sm:$0xf]
  %v169 = vld [vmem:[%s5 + $0x28] sm:$0xf]
  %v170 = vld [vmem:[%s5 + $0x2c] sm:$0xf]
  %v171 = vld [vmem:[%s5 + $0x30] sm:$0xf]
  %v172 = vld [vmem:[%s5 + $0x34] sm:$0xf]
  %v173 = vld [vmem:[%s5 + $0x38] sm:$0xf]
  %v174 = vld [vmem:[%s5 + $0x3c] sm:$0xf]
  %v175 = vld [vmem:[%s6] sm:$0x1]
  %v177 = vperm.slane %v175, 0
  %v195 = vunpack.c.l.b16 %v159
  %v196 = vunpack.c.l.b16 %v160
  %v197 = vunpack.c.l.b16 %v161
  %v198 = vunpack.c.l.b16 %v162
  %v199 = vunpack.c.l.b16 %v163
  %v200 = vunpack.c.l.b16 %v164
  %v201 = vunpack.c.l.b16 %v165
  %v202 = vunpack.c.l.b16 %v166
  %v203 = vunpack.c.l.b16 %v167
  %v204 = vunpack.c.l.b16 %v168
  %v205 = vunpack.c.l.b16 %v169
  %v206 = vunpack.c.l.b16 %v170
  %v207 = vunpack.c.l.b16 %v171
  %v208 = vunpack.c.l.b16 %v172
  %v209 = vunpack.c.l.b16 %v173
  %v210 = vunpack.c.l.b16 %v174
  %v211 = vpack.c.b16 %v196, %v195
  %v212 = vpack.c.b16 %v198, %v197
  %v213 = vpack.c.b16 %v200, %v199
  %v214 = vpack.c.b16 %v202, %v201
  %v215 = vpack.c.b16 %v204, %v203
  %v216 = vpack.c.b16 %v206, %v205
  %v217 = vpack.c.b16 %v208, %v207
  %v218 = vpack.c.b16 %v210, %v209
  %227 = vmatpush.bf16.msra.mxu0 %v218
  %228 = vmatpush.bf16.msra.mxu0 %v217
  %229 = vmatpush.bf16.msra.mxu0 %v216
  %230 = vmatpush.bf16.msra.mxu0 %v215
  %231 = vmatpush.bf16.msra.mxu0 %v214
  %232 = vmatpush.bf16.msra.mxu0 %v213
  %233 = vmatpush.bf16.msra.mxu0 %v212
  %234 = vmatpush.bf16.msra.mxu0 %v211
  %235 = vmatmul.bf16.gmra.mxu0 %v158
  %v236 = vpop.f32.mrf.mxu0
  %v237 = vadd.f32 %v177, %v236
  %v238 = vpop.f32.mrf.mxu0
  %239 = vdwg.mxu0
  %v240 = vmax.f32 %v237, 0.0
  %v241 = vld [vmem:[%s7] sm:$0x1]
  %v243 = vperm.slane %v241, 0
  %v245 = vmul.f32 %v240, %v243
  %246 = vadd.xlane.f32.xlu0 %v245
  %v247 = vpop.xlane.xlu0 %246
  %v248 = vld [vmem:[#allocation2] sm:$0x1]
  %v250 = vperm.slane %v248, 0
  %v252 = vadd.f32 %v247, %v250
  %vm253 = vcmask 7168
  %254 = vst.msk [vmem:[%s9] sm:$0xff] %vm253, %v252
  // Predicated region
  $region38: #{value_net_forward.1} parent=0 // pred_check
    _
  $region39: #{value_net_forward.1} parent=0 // pred_check_branch
    %256 = sbr.rel (0) target = $region41
  $region40: #{value_net_forward.1} parent=0 // pred_region
    _
  $region41: #{value_net_forward.1} parent=0 // pred_fallthru
    _
  // Predicated region
  $region42: #{value_net_forward.1} parent=0 // pred_check
    _
  $region43: #{value_net_forward.1} parent=0 // pred_check_branch
    %258 = sbr.rel (0) target = $region45
  $region44: #{value_net_forward.1} parent=0 // pred_region
    _
  $region45: #{value_net_forward.1} parent=0 // pred_fallthru
    _

</llo_original>
